<compile_context>
chip_gen: v6e
topology: v6e:2x2x1
jax: 0.10.0
libtpu: 0.0.40
codegen_flags: <defaults>
</compile_context>

<pallas_src>
import functools

import numpy as np
import jax
import jax.numpy as jnp
from jax import lax
from jax.experimental import pallas as pl
from jax.experimental.pallas import tpu as pltpu

# ------------------------- STOI constants (pystoi) -------------------------
FS = 10000          # target sample rate
N_FRAME = 256       # analysis window length at FS
NUMBAND = 15        # number of 1/3 octave bands
MINFREQ = 150       # center frequency of lowest band
N = 30              # frames per short-term segment (intel_frames)
BETA = -15.0        # lower SDR bound
DYN_RANGE = 40.0    # VAD dynamic range
EPS = 1e-8
OUT_LANES = 128     # lane-dense band axis (NUMBAND padded with zeros)
SEG_TILE_MAX = 128  # max segments handled per kernel-2 grid step


def thirdoct(fs, nfft, num_bands, min_freq):
    """One-third octave band matrix (same as pystoi.utils.thirdoct)."""
    f = np.linspace(0, fs, nfft + 1)
    f = f[: nfft // 2 + 1]
    k = np.arange(num_bands).astype(float)
    cf = (2.0 ** (1.0 / 3)) ** k * min_freq
    freq_low = min_freq * np.power(2.0, (2 * k - 1) / 6)
    freq_high = min_freq * np.power(2.0, (2 * k + 1) / 6)
    obm = np.zeros((num_bands, len(f)))
    for i in range(len(cf)):
        fl_ii = int(np.argmin(np.square(f - freq_low[i])))
        fh_ii = int(np.argmin(np.square(f - freq_high[i])))
        obm[i, fl_ii:fh_ii] = 1
    return obm.astype(np.float32), cf


# ------------------- Pallas kernel 1: fused DFT power + OBM bands ----------
def spectral_kernel(frames_ref, dftm_ref, obm_ref, tob_ref, *, nbins):
    # frames: (TF, 256) bf16; dftm: (256, 512) bf16 (window folded in)
    # obm:    (256, 128) bf16 (0/1 bands, zero-padded lanes); tob: (TF, 128) f32
    z = jnp.dot(frames_ref[...], dftm_ref[...],
                preferred_element_type=jnp.float32)          # (TF, 2*nbins) f32
    re = z[:, :nbins]
    im = z[:, nbins:]
    # OBM is 0/1 -> bf16 on that side is exact; bf16 power keeps the second
    # matmul single-pass on the MXU (f32 matmuls are multi-pass on all chips).
    power = (re * re + im * im).astype(jnp.bfloat16)          # (TF, nbins)
    tob_ref[...] = jnp.sqrt(
        jnp.dot(power, obm_ref[...], preferred_element_type=jnp.float32))


def _pick_frame_tile(F):
    """Frame tile: as large as VMEM comfortably allows (cap 1024), but with at
    least two grid steps whenever possible so both v7x TensorCores get work."""
    F16 = ((max(F, 1) + 15) // 16) * 16
    if F16 <= 16:
        return F16
    half = ((F16 // 2) + 15) // 16 * 16
    return max(16, min(1024, half))


def tob_from_frames_pallas(frames_bf16, dftm_bf16, obm_bf16):
    F, W = frames_bf16.shape
    nbins = dftm_bf16.shape[1] // 2
    TF = _pick_frame_tile(F)
    Fp = pl.cdiv(F, TF) * TF
    if Fp != F:
        frames_bf16 = jnp.pad(frames_bf16, ((0, Fp - F), (0, 0)))
    kern = functools.partial(spectral_kernel, nbins=nbins)
    out = pl.pallas_call(
        kern,
        out_shape=jax.ShapeDtypeStruct((Fp, OUT_LANES), jnp.float32),
        grid=(Fp // TF,),
        in_specs=[
            pl.BlockSpec((TF, W), lambda i: (i, 0)),
            pl.BlockSpec((W, 2 * nbins), lambda i: (0, 0)),
            pl.BlockSpec((nbins, OUT_LANES), lambda i: (0, 0)),
        ],
        out_specs=pl.BlockSpec((TF, OUT_LANES), lambda i: (i, 0)),
        compiler_params=pltpu.CompilerParams(
            dimension_semantics=("parallel",),
            vmem_limit_bytes=32 * 1024 * 1024,
        ),
    )(frames_bf16, dftm_bf16, obm_bf16)
    return out[:F]


# ------------- Pallas kernel 2: masked STOI correlation ---------------------
def stoi_corr_kernel(x_ref, y_ref, m_ref, w_ref, out_ref,
                     nc_sc, mx_sc, im_sc, *, seg_tile, tblk, n_seg):
    # x_ref / y_ref: (1, T_pad, 128) f32; m_ref: (1, T_pad, 1) f32 0/1 mask
    # w_ref: (seg_tile, tblk) f32 banded 0/1 window-selection matrix
    # out_ref: (1, 1, 8, 128); scratch: (seg_tile, 128) f32 x3
    clip_p1 = 1.0 + 10.0 ** (-BETA / 20.0)
    seg0 = pl.multiple_of(pl.program_id(1) * seg_tile, 8)

    # ---- hoisted per-segment window statistics on the (otherwise idle) MXU ----
    xs = x_ref[0, pl.ds(seg0, tblk), :]                            # (tblk, 128)
    ys = y_ref[0, pl.ds(seg0, tblk), :]
    msb = jnp.broadcast_to(m_ref[0, pl.ds(seg0, tblk), :],
                           (tblk, OUT_LANES))                      # broadcast once
    w = w_ref[...]                                                 # (seg_tile, tblk)

    xm = xs * msb
    ym = ys * msb
    sxx = jnp.dot(w, xm * xs, preferred_element_type=jnp.float32)  # sum m*x^2
    syy = jnp.dot(w, ym * ys, preferred_element_type=jnp.float32)  # sum m*y^2
    sx = jnp.dot(w, xm, preferred_element_type=jnp.float32)        # sum m*x
    msum = jnp.dot(w, msb, preferred_element_type=jnp.float32)     # sum m (all lanes)

    inv_m = pl.reciprocal(msum + EPS, approx=True)                 # EUP
    nc_sc[...] = jnp.sqrt(sxx) * pl.reciprocal(jnp.sqrt(syy) + EPS, approx=True)
    mx_sc[...] = sx * inv_m
    im_sc[...] = inv_m

    # ---- per-segment loop: only the clip-dependent part remains -------------
    def body(i, acc):
        s = seg0 + i
        xw = x_ref[0, pl.ds(s, N), :]                              # (N, 128)
        yw = y_ref[0, pl.ds(s, N), :]
        mb = jnp.broadcast_to(m_ref[0, pl.ds(s, N), :], (N, OUT_LANES))

        nc = nc_sc[pl.ds(i, 1), :]                                 # (1, 128)
        mx = mx_sc[pl.ds(i, 1), :]
        im = im_sc[pl.ds(i, 1), :]

        yp = jnp.minimum(yw * nc, xw * clip_p1)                    # clipped, normed y
        mean_yp = jnp.sum(yp * mb, axis=0, keepdims=True) * im     # reduction 1

        xc = (xw - mx) * mb
        yc = (yp - mean_yp) * mb
        vx = jnp.sum(xc * xc, axis=0, keepdims=True)               # reduction 2
        vy = jnp.sum(yc * yc, axis=0, keepdims=True)               # reduction 3
        cross = jnp.sum(xc * yc, axis=0, keepdims=True)            # reduction 4

        inv_nx = pl.reciprocal(jnp.sqrt(vx) + EPS, approx=True)
        inv_ny = pl.reciprocal(jnp.sqrt(vy) + EPS, approx=True)
        valid = (s < n_seg).astype(jnp.float32)                    # zero out padded segs
        return acc + (valid * cross) * (inv_nx * inv_ny)

    acc = lax.fori_loop(0, seg_tile, body,
                        jnp.zeros((1, OUT_LANES), jnp.float32), unroll=2)
    # lane-dense per-band partial sums; tile + band reduction happens in the wrapper
    out_ref[0, 0, :, :] = jnp.broadcast_to(acc, (8, OUT_LANES))


def stoi_numerators_pallas(x_tob, y_tob, mask, n_seg):
    B, T, C = x_tob.shape
    n_tiles = pl.cdiv(n_seg, SEG_TILE_MAX)
    seg_tile = ((pl.cdiv(n_seg, n_tiles) + 7) // 8) * 8
    n_tiles = pl.cdiv(n_seg, seg_tile)
    tblk = seg_tile + 32                       # >= seg_tile + N - 1, multiple of 8
    t_pad = n_tiles * seg_tile + 32            # covers last tile's (seg0 + tblk) reach
    pad_t = t_pad - T
    x_p = jnp.pad(x_tob, ((0, 0), (0, pad_t), (0, 0)))
    y_p = jnp.pad(y_tob, ((0, 0), (0, pad_t), (0, 0)))
    m_p = jnp.pad(mask, ((0, 0), (0, pad_t)))[..., None]           # (B, t_pad, 1)

    # Banded 0/1 window-selection matrix; identical for every segment tile,
    # so it stays resident in VMEM across all grid steps.
    ii = np.arange(seg_tile)[:, None]
    jj = np.arange(tblk)[None, :]
    w_local = jnp.asarray(((jj >= ii) & (jj < ii + N)).astype(np.float32))

    kern = functools.partial(stoi_corr_kernel,
                             seg_tile=seg_tile, tblk=tblk, n_seg=n_seg)
    out = pl.pallas_call(
        kern,
        out_shape=jax.ShapeDtypeStruct((B, n_tiles, 8, OUT_LANES), jnp.float32),
        grid=(B, n_tiles),
        in_specs=[
            pl.BlockSpec((1, t_pad, C), lambda b, t: (b, 0, 0)),
            pl.BlockSpec((1, t_pad, C), lambda b, t: (b, 0, 0)),
            pl.BlockSpec((1, t_pad, 1), lambda b, t: (b, 0, 0)),
            pl.BlockSpec((seg_tile, tblk), lambda b, t: (0, 0)),
        ],
        out_specs=pl.BlockSpec((1, 1, 8, OUT_LANES), lambda b, t: (b, t, 0, 0)),
        scratch_shapes=[
            pltpu.VMEM((seg_tile, OUT_LANES), jnp.float32),   # norm_const
            pltpu.VMEM((seg_tile, OUT_LANES), jnp.float32),   # mean_x
            pltpu.VMEM((seg_tile, OUT_LANES), jnp.float32),   # 1/(msum + eps)
        ],
        compiler_params=pltpu.CompilerParams(
            dimension_semantics=("parallel", "parallel"),
            vmem_limit_bytes=48 * 1024 * 1024,
        ),
    )(x_p, y_p, m_p, w_local)
    # (B, n_tiles, 8, 128): row 0 holds the per-band partials; padded lanes are 0.
    return jnp.sum(out[:, :, 0, :], axis=(1, 2))


# ----------------------------- pure-JAX references --------------------------
def tob_from_frames_ref(frames_f32, dftm_f32, obm_pad_f32):
    nbins = dftm_f32.shape[1] // 2
    z = frames_f32 @ dftm_f32
    re, im = z[:, :nbins], z[:, nbins:]
    return jnp.sqrt((re * re + im * im) @ obm_pad_f32)


def stoi_numerators_ref(x_tob, y_tob, mask, n_seg):
    # x_tob / y_tob: (B, T, 128); mask: (B, T)
    sidx = np.arange(n_seg)[:, None] + np.arange(N)[None, :]      # (S, N)
    x_seg = x_tob[:, sidx, :]                                     # (B, S, N, 128)
    y_seg = y_tob[:, sidx, :]
    m = mask[:, sidx][..., None]                                  # (B, S, N, 1)
    clip_val = 10.0 ** (-BETA / 20.0)
    norm_x = jnp.sqrt(jnp.sum((x_seg * m) ** 2, axis=2, keepdims=True))
    norm_y = jnp.sqrt(jnp.sum((y_seg * m) ** 2, axis=2, keepdims=True))
    norm_const = norm_x / (norm_y + EPS)
    y_prim = jnp.minimum(y_seg * norm_const, x_seg * (1.0 + clip_val))
    msum = jnp.sum(m, axis=2, keepdims=True) + EPS

    def mv_norm(z):
        mean = jnp.sum(z * m, axis=2, keepdims=True) / msum
        zc = z - mean
        nrm = jnp.sqrt(jnp.sum((zc * m) ** 2, axis=2, keepdims=True)) + EPS
        return zc / nrm

    corr = mv_norm(y_prim) * mv_norm(x_seg) * m
    return jnp.sum(corr, axis=(1, 2, 3))


# ------------------------------- the module ---------------------------------
class NegSTOILossPallas:
    """Negated STOI loss (use_vad=True, extended=False)."""

    def __init__(self, sample_rate, use_vad=True, extended=False, do_resample=True):
        if do_resample and sample_rate != FS:
            # TODO(synk): torchaudio sinc-interpolation resampling has no clean Pallas equivalent.
            raise NotImplementedError("resampling not implemented; use sample_rate == FS")
        if extended:
            # TODO(synk): extended (ESTOI) row/col normalization branch not implemented.
            raise NotImplementedError("extended=True not implemented")
        if not use_vad:
            raise NotImplementedError("only use_vad=True path implemented")
        self.win_len = N_FRAME * sample_rate // FS            # 256
        self.nfft = 2 * self.win_len                          # 512
        self.hop = self.win_len // 2                          # 128
        self.nbins = self.nfft // 2                           # 256 (Nyquist bin dropped)

        obm, _ = thirdoct(FS, self.nfft, NUMBAND, MINFREQ)    # (15, nfft//2 + 1)
        # The dropped bin(s) must carry zero OBM weight (highest band edge ~4.3kHz).
        if not np.all(obm[:, self.nbins:] == 0):
            raise ValueError("OBM has weight above the trimmed bin range")
        obm_pad = np.zeros((self.nbins, OUT_LANES), np.float32)
        obm_pad[:, :NUMBAND] = obm[:, : self.nbins].T
        self.obm_pad_f32 = jnp.asarray(obm_pad)               # (nbins, 128), lane-dense
        self.obm_pad_bf16 = jnp.asarray(obm_pad, dtype=jnp.bfloat16)  # 0/1 -> exact

        # Fused, window-folded, bin-trimmed DFT matrix.
        win = np.hanning(self.win_len + 2)[1:-1].astype(np.float64)
        pad_l = (self.nfft - self.win_len) // 2
        self.frame_offset = pad_l
        m = np.arange(self.win_len)[:, None].astype(np.float64) + pad_l
        k = np.arange(self.nbins)[None, :].astype(np.float64)
        ang = 2.0 * np.pi * m * k / self.nfft
        cos_part = win[:, None] * np.cos(ang)
        sin_part = win[:, None] * (-np.sin(ang))
        dftm = np.concatenate([cos_part, sin_part], axis=1).astype(np.float32)
        self.dftm_f32 = jnp.asarray(dftm)                          # (256, 512)
        self.dftm_bf16 = jnp.asarray(dftm, dtype=jnp.bfloat16)

    def __call__(self, est_targets, targets, use_pallas=True):
        if targets.shape != est_targets.shape:
            raise RuntimeError("targets and est_targets should have the same shape")
        if targets.ndim == 1:
            return self(est_targets[None], targets[None], use_pallas)[0]
        if targets.ndim > 2:
            *inner, wav_len = targets.shape
            flat = self(est_targets.reshape(-1, wav_len), targets.reshape(-1, wav_len), use_pallas)
            return flat.reshape(inner)

        targets = targets.astype(jnp.float32)
        est_targets = est_targets.astype(jnp.float32)
        B, L = targets.shape
        hop, nfft, win_len = self.hop, self.nfft, self.win_len

        # ---- STFT frames (torch.stft, center=False, extra hop of zero padding) ----
        xp = jnp.pad(targets, ((0, 0), (0, hop)))
        yp = jnp.pad(est_targets, ((0, 0), (0, hop)))
        Lp = L + hop
        T = (Lp - nfft) // hop + 1
        S = T - N + 1
        if S < 1:
            raise ValueError(
                f"input too short: {T} STFT frames < {N} frames per STOI segment")
        # window folded into the DFT matrix -> only the win_len non-zero samples needed
        idx = np.arange(T)[:, None] * hop + self.frame_offset + np.arange(win_len)[None, :]
        xf = xp[:, idx]                                       # (B, T, win_len)
        yf = yp[:, idx]
        frames = jnp.concatenate([xf, yf], axis=0).reshape(2 * B * T, win_len)

        if use_pallas:
            tob = tob_from_frames_pallas(frames.astype(jnp.bfloat16),
                                         self.dftm_bf16, self.obm_pad_bf16)
        else:
            tob = tob_from_frames_ref(frames, self.dftm_f32, self.obm_pad_f32)
        # (2*B*T, 128) -> (2, B, T, 128): no transpose, T stays on sublanes.
        tob = tob.reshape(2, B, T, OUT_LANES)
        x_tob, y_tob = tob[0], tob[1]

        # ---- VAD mask on the clean targets (un-windowed frames, as in the spec) ----
        Tv = (L - win_len) // hop + 1
        vidx = np.arange(Tv)[:, None] * hop + np.arange(win_len)[None, :]
        vframes = targets[:, vidx][:, :-1, :]                 # drop last frame
        energies = 20.0 * jnp.log10(jnp.sqrt(jnp.sum(vframes ** 2, axis=-1)) + EPS)
        mask = (jnp.max(energies, axis=-1, keepdims=True) - DYN_RANGE - energies) < 0
        pad_amt = T - mask.shape[-1]
        if pad_amt >= 0:
            mask = jnp.pad(mask, ((0, 0), (0, pad_amt)))
        else:
            mask = mask[:, :T]
        mask = mask.astype(jnp.float32)                       # (B, T)

        # ---- short-term segments handled inside kernel 2 (no 30x unfold in HBM) ----
        # mean of the (virtually) unfolded mask via per-frame overlap counts
        t = np.arange(T)
        counts = (np.minimum(t, S - 1) - np.maximum(0, t - N + 1) + 1).astype(np.float32)
        mask_f_mean = jnp.sum(mask * counts) / float(B * N * S)
        correction = NUMBAND * S * mask_f_mean + EPS          # global mask mean (as in torch)

        if use_pallas:
            numer = stoi_numerators_pallas(x_tob, y_tob, mask, S)
        else:
            numer = stoi_numerators_ref(x_tob, y_tob, mask, S)
        return -numer / correction


# ---------------------------------- main -------------------------------------
if __name__ == "__main__":
    key = jax.random.PRNGKey(0)
    k1, k2 = jax.random.split(key)
    batch, time = 2, 4608   # -> 34 STFT frames, 5 short-term segments
    targets = jax.random.normal(k1, (batch, time), dtype=jnp.float32)
    est_targets = targets + 0.5 * jax.random.normal(k2, (batch, time), dtype=jnp.float32)

    loss_mod = NegSTOILossPallas(sample_rate=FS, use_vad=True, extended=False)

    loss = loss_mod(est_targets, targets, use_pallas=True)
    loss = jax.block_until_ready(loss)

    loss_ref = jax.block_until_ready(loss_mod(est_targets, targets, use_pallas=False))
    np.testing.assert_allclose(np.asarray(loss), np.asarray(loss_ref), rtol=5e-2, atol=1e-2)

    assert loss.shape == (batch,)
    print("KERNEL_OK")
</pallas_src>

<mosaic_0001>
module attributes {stable_mosaic.version = 11 : i64} {
  func.func @spectral_kernel(%arg0: i32, %arg1: memref<80x256xbf16, #tpu.memory_space<vmem>>, %arg2: memref<256x512xbf16, #tpu.memory_space<vmem>>, %arg3: memref<256x128xbf16, #tpu.memory_space<vmem>>, %arg4: memref<80x128xf32, #tpu.memory_space<vmem>>) attributes {dimension_semantics = [#tpu.dimension_semantics<parallel>], iteration_bounds = array<i64: 2>, scalar_prefetch = 0 : i64, scratch_operands = 0 : i64, tpu.core_type = #tpu.core_type<tc>, window_params = [{transform_indices = @transform_0, window_bounds = array<i64: 80, 256>}, {pipeline_mode = #tpu.pipeline_mode<synchronous>, transform_indices = @transform_1, window_bounds = array<i64: 256, 512>}, {pipeline_mode = #tpu.pipeline_mode<synchronous>, transform_indices = @transform_2, window_bounds = array<i64: 256, 128>}, {transform_indices = @transform_3, window_bounds = array<i64: 80, 128>}]} {
    %c0 = arith.constant 0 : index
    %c0_0 = arith.constant 0 : index
    %0 = vector.load %arg1[%c0, %c0_0] : memref<80x256xbf16, #tpu.memory_space<vmem>>, vector<80x256xbf16>
    %c0_1 = arith.constant 0 : index
    %c0_2 = arith.constant 0 : index
    %1 = vector.load %arg2[%c0_1, %c0_2] : memref<256x512xbf16, #tpu.memory_space<vmem>>, vector<256x512xbf16>
    %cst = arith.constant dense<0.000000e+00> : vector<80x512xf32>
    %2 = tpu.matmul %0, %1, %cst {dimension_numbers = #tpu.dot_dimension_numbers<[1], [0], [0], [1], [0, 0, 1, 1], [], []>} : vector<80x256xbf16>, vector<256x512xbf16>, vector<80x512xf32> -> vector<80x512xf32>
    %3 = vector.extract_strided_slice %2 {offsets = [0, 0], sizes = [80, 256], strides = [1, 1]} : vector<80x512xf32> to vector<80x256xf32>
    %4 = vector.extract_strided_slice %2 {offsets = [0, 256], sizes = [80, 256], strides = [1, 1]} : vector<80x512xf32> to vector<80x256xf32>
    %5 = arith.mulf %3, %3 : vector<80x256xf32>
    %6 = arith.mulf %4, %4 : vector<80x256xf32>
    %7 = arith.addf %5, %6 : vector<80x256xf32>
    %8 = arith.truncf %7 : vector<80x256xf32> to vector<80x256xbf16>
    %c0_3 = arith.constant 0 : index
    %c0_4 = arith.constant 0 : index
    %9 = vector.load %arg3[%c0_3, %c0_4] : memref<256x128xbf16, #tpu.memory_space<vmem>>, vector<256x128xbf16>
    %cst_5 = arith.constant dense<0.000000e+00> : vector<80x128xf32>
    %10 = tpu.matmul %8, %9, %cst_5 {dimension_numbers = #tpu.dot_dimension_numbers<[1], [0], [0], [1], [0, 0, 1, 1], [], []>} : vector<80x256xbf16>, vector<256x128xbf16>, vector<80x128xf32> -> vector<80x128xf32>
    %11 = math.sqrt %10 : vector<80x128xf32>
    %c0_6 = arith.constant 0 : index
    %c0_7 = arith.constant 0 : index
    %12 = vector.load %arg4[%c0_6, %c0_7] : memref<80x128xf32, #tpu.memory_space<vmem>>, vector<80x128xf32>
    tpu.vector_store %arg4[%c0_6, %c0_7], %11 {strides = array<i32>} : memref<80x128xf32, #tpu.memory_space<vmem>>, vector<80x128xf32>,
    return
  }
  func.func @transform_0(%arg0: i32) -> (i32, i32) {
    %c0_i32 = arith.constant 0 : i32
    %c0_i32_0 = arith.constant 0 : i32
    return %arg0, %c0_i32 : i32, i32
  }
  func.func @transform_1(%arg0: i32) -> (i32, i32) {
    %c0_i32 = arith.constant 0 : i32
    %c0_i32_0 = arith.constant 0 : i32
    %c0_i32_1 = arith.constant 0 : i32
    return %c0_i32, %c0_i32_0 : i32, i32
  }
  func.func @transform_2(%arg0: i32) -> (i32, i32) {
    %c0_i32 = arith.constant 0 : i32
    %c0_i32_0 = arith.constant 0 : i32
    %c0_i32_1 = arith.constant 0 : i32
    return %c0_i32, %c0_i32_0 : i32, i32
  }
  func.func @transform_3(%arg0: i32) -> (i32, i32) {
    %c0_i32 = arith.constant 0 : i32
    %c0_i32_0 = arith.constant 0 : i32
    return %arg0, %c0_i32 : i32, i32
  }
}

</mosaic_0001>

<llo_original>
// kernel: tpu_custom_call.1
$region0: #{tpu_custom_call.1}
  #allocation0 [shape = 'u32[]', space=smem, size = 0x4, offset = 0x4, fixed_abs, tag = 'smem constant byte address 0x4 - core index']
  #allocation1 [shape = 'u32[144,128]{1,0:T(1,128)}', space=vmem, size = 0x12000, scoped, tag = 'internal scratch']
  %s0 = inlined_call_operand.hbm [shape: bf16[160,256], index: 0, kind: input, shape index: {}]
  %s1 = inlined_call_operand.hbm [shape: bf16[256,512], index: 1, kind: input, shape index: {}]
  %s2 = inlined_call_operand.hbm [shape: bf16[256,128], index: 2, kind: input, shape index: {}]
  %s3 = inlined_call_operand.hbm [shape: f32[160,128], index: 3, kind: output, shape index: {}]
  %s4 = sld [smem:[#allocation0]]
  $region57: #{tpu_custom_call.1} parent=0
    _
  %s6 = ssub.s32 1, %s4
  %s7 = scalar_select 0, %s6, %s4
  $region1: #{tpu_custom_call.1} parent=0
    #allocation2 [shape = 'u8[81920]{0}', space=vmem, size = 0x14000, scoped, tag = 'input window, operand 0']
    #allocation3 [shape = 's32[2]{0}', space=sflag, size = 0x8, scoped, tag = 'scoped memory for tpu_custom_call.1']
    #allocation4 [shape = 's32[2]{0}', space=sflag, size = 0x8, scoped, tag = 'scoped memory for tpu_custom_call.1']
    #allocation5 [shape = 'u8[262144]{0}', space=vmem, size = 0x40000, scoped, tag = 'input window, operand 1, single buffered']
    #allocation6 [shape = 's32[1]{0}', space=sflag, size = 0x4, scoped, tag = 'scoped memory for tpu_custom_call.1']
    #allocation7 [shape = 'u8[65536]{0}', space=vmem, size = 0x10000, scoped, tag = 'input window, operand 2, single buffered']
    #allocation8 [shape = 'u8[81920]{0}', space=vmem, size = 0x14000, scoped, tag = 'output window, operand 0']
    %8 = vsyncpa [#allocation3], 0
    %s9 = scalar_lea.sflag [#allocation3], 1
    %10 = vsyncpa %s9, 0
    %11 = vsyncpa [#allocation6], 0
    %12 = vsyncpa [#allocation4], 0
    %s13 = scalar_lea.sflag [#allocation4], 1
    %14 = vsyncpa %s13, 0
    loop: start=0, step=1, limit=4
    $region2: #{tpu_custom_call.1} parent=1 // loop_pre_header
      _
    $region3: #{tpu_custom_call.1} parent=1 // loop_header
      %s16 = sphi 0, %s20
      %p17 = scmp.ge.s32.totalorder %s16, 4
      %s26 = sphi 0, %s28
      %s29 = sphi 0, %s26
      %s30 = sphi 0, %s29
      %s46 = sphi 0, %s30
      %s50 = sphi 0, %s50
      %s52 = sphi 0, %s50
      %s53 = sphi 0, %s52
      %s67 = sphi 0, %s53
      %s71 = sphi 0, %s71
      %s73 = sphi 0, %s71
      %s74 = sphi 0, %s73
      %s88 = sphi 0, %s74
      %s94 = sphi 0, %s96
      %s97 = sphi 0, %s94
      %s98 = sphi 0, %s97
      %s114 = sphi 0, %s98
    $region4: #{tpu_custom_call.1} parent=1 // loop_header_branch
      %19 = sbr.rel (%p17) target = $region8
    $region5: #{tpu_custom_call.1} parent=1 // loop_body
      %s21 = ssub.s32 %s16, 1
      %s22 = ssub.s32 %s16, 2
      %s23 = sadd.s32 %s16, 1
      %s24 = ssub.s32 %s16, %s23
      %p25 = scmp.eq.s32.totalorder %s24, 0
      %s27 = sadd.s32 %s26, 1
      %s28 = scalar_select %p25, %s26, %s27
      %p31 = pneg %p25
      %p32 = scmp.eq.s32.totalorder %s16, 1
      %p33 = por %p31, %p32
      %p34 = scmp.ne.s32.totalorder %s26, %s29
      %p35 = scmp.eq.s32.totalorder %s16, 0
      %p36 = por %p34, %p35
      %p37 = scmp.ne.s32.totalorder %s26, %s29
      %p38 = scmp.eq.s32.totalorder %s21, 1
      %p39 = por %p37, %p38
      %p40 = scmp.ne.s32.totalorder %s29, %s30
      %p41 = scmp.eq.s32.totalorder %s21, 0
      %p42 = por %p40, %p41
      %p43 = scmp.ne.s32.totalorder %s29, %s30
      %p44 = scmp.eq.s32.totalorder %s22, 1
      %p45 = por %p43, %p44
      %p47 = scmp.ne.s32.totalorder %s30, %s46
      %p48 = scmp.eq.s32.totalorder %s22, 0
      %p49 = por %p47, %p48
      %s51 = sadd.s32 %s50, 1
      %p54 = scmp.eq.s32.totalorder %s16, 1
      %p55 = scmp.ne.s32.totalorder %s50, %s52
      %p56 = scmp.eq.s32.totalorder %s16, 0
      %p57 = por %p55, %p56
      %p58 = scmp.ne.s32.totalorder %s50, %s52
      %p59 = scmp.eq.s32.totalorder %s21, 1
      %p60 = por %p58, %p59
      %p61 = scmp.ne.s32.totalorder %s52, %s53
      %p62 = scmp.eq.s32.totalorder %s21, 0
      %p63 = por %p61, %p62
      %p64 = scmp.ne.s32.totalorder %s52, %s53
      %p65 = scmp.eq.s32.totalorder %s22, 1
      %p66 = por %p64, %p65
      %p68 = scmp.ne.s32.totalorder %s53, %s67
      %p69 = scmp.eq.s32.totalorder %s22, 0
      %p70 = por %p68, %p69
      %s72 = sadd.s32 %s71, 1
      %p75 = scmp.eq.s32.totalorder %s16, 1
      %p76 = scmp.ne.s32.totalorder %s71, %s73
      %p77 = scmp.eq.s32.totalorder %s16, 0
      %p78 = por %p76, %p77
      %p79 = scmp.ne.s32.totalorder %s71, %s73
      %p80 = scmp.eq.s32.totalorder %s21, 1
      %p81 = por %p79, %p80
      %p82 = scmp.ne.s32.totalorder %s73, %s74
      %p83 = scmp.eq.s32.totalorder %s21, 0
      %p84 = por %p82, %p83
      %p85 = scmp.ne.s32.totalorder %s73, %s74
      %p86 = scmp.eq.s32.totalorder %s22, 1
      %p87 = por %p85, %p86
      %p89 = scmp.ne.s32.totalorder %s74, %s88
      %p90 = scmp.eq.s32.totalorder %s22, 0
      %p91 = por %p89, %p90
      %s92 = ssub.s32 %s16, %s23
      %p93 = scmp.eq.s32.totalorder %s92, 0
      %s95 = sadd.s32 %s94, 1
      %s96 = scalar_select %p93, %s94, %s95
      %p99 = pneg %p93
      %p100 = scmp.eq.s32.totalorder %s16, 1
      %p101 = por %p99, %p100
      %p102 = scmp.ne.s32.totalorder %s94, %s97
      %p103 = scmp.eq.s32.totalorder %s16, 0
      %p104 = por %p102, %p103
      %p105 = scmp.ne.s32.totalorder %s94, %s97
      %p106 = scmp.eq.s32.totalorder %s21, 1
      %p107 = por %p105, %p106
      %p108 = scmp.ne.s32.totalorder %s97, %s98
      %p109 = scmp.eq.s32.totalorder %s21, 0
      %p110 = por %p108, %p109
      %p111 = scmp.ne.s32.totalorder %s97, %s98
      %p112 = scmp.eq.s32.totalorder %s22, 1
      %p113 = por %p111, %p112
      %p115 = scmp.ne.s32.totalorder %s98, %s114
      %p116 = scmp.eq.s32.totalorder %s22, 0
      %p117 = por %p115, %p116
      %p118 = scmp.le.s32.totalorder 1, %s16
      %p119 = scmp.lt.s32.totalorder %s16, 3
      %p120 = pnand %p118, %p119
      %p121 = pneg %p120
      // Predicated region
      $region9: #{tpu_custom_call.1} parent=5 // pred_check
        _
      $region10: #{tpu_custom_call.1} parent=5 // pred_check_branch
        %123 = sbr.rel (%p120) target = $region12
      $region11: #{tpu_custom_call.1} parent=5 // pred_region
        %s124 = ssub.s32 %s16, 1
        // Predicated region
        $region13: #{tpu_custom_call.1} parent=11 // pred_check
          %p125 = pneg %p63
        $region14: #{tpu_custom_call.1} parent=11 // pred_check_branch
          %127 = sbr.rel (%p125) target = $region16
        $region15: #{tpu_custom_call.1} parent=11 // pred_region
          %s129 = ssub.s32 8192, 8192
          %130 = vsyncadd [#allocation6], %s129
          %s131 = sshll.u32 [#allocation5], 4
          %s132 = int_to_ptr.vmem [resolvable:$true] %s131
          %137 = dma.hbm_to_vmem [thread:$0]  %s1, 8192, %s132, [#allocation6], 256, 256, 16
        $region16: #{tpu_custom_call.1} parent=11 // pred_fallthru
          _
        // Predicated region
        $region17: #{tpu_custom_call.1} parent=11 // pred_check
          %p138 = pneg %p84
        $region18: #{tpu_custom_call.1} parent=11 // pred_check_branch
          %140 = sbr.rel (%p138) target = $region20
        $region19: #{tpu_custom_call.1} parent=11 // pred_region
          %s142 = ssub.s32 2048, 2048
          %143 = vsyncadd [#allocation6], %s142
          %s144 = sshll.u32 [#allocation7], 4
          %s145 = int_to_ptr.vmem [resolvable:$true] %s144
          %150 = dma.hbm_to_vmem [thread:$0]  %s2, 2048, %s145, [#allocation6], 64, 64, 4
        $region20: #{tpu_custom_call.1} parent=11 // pred_fallthru
          _
      $region12: #{tpu_custom_call.1} parent=5 // pred_fallthru
        _
      %p151 = scmp.lt.s32.totalorder %s16, 2
      // Predicated region
      $region21: #{tpu_custom_call.1} parent=5 // pred_check
        %p152 = pneg %p151
      $region22: #{tpu_custom_call.1} parent=5 // pred_check_branch
        %154 = sbr.rel (%p152) target = $region24
      $region23: #{tpu_custom_call.1} parent=5 // pred_region
        // Predicated region
        $region25: #{tpu_custom_call.1} parent=23 // pred_check
          %p155 = pneg %p36
        $region26: #{tpu_custom_call.1} parent=23 // pred_check_branch
          %157 = sbr.rel (%p155) target = $region28
        $region27: #{tpu_custom_call.1} parent=23 // pred_region
          %s158 = sand.u32 %s26, 1
          %s159 = scalar_lea.sflag [#allocation3], %s158
          %s160 = sand.u32 %s26, 1
          %s161 = smul.addr %s160, 80
          %s162 = scalar_lea.vmem [#allocation2], %s161
          %s163 = smul.u32 10, %s16
          %s165 = ssub.s32 1280, 1280
          %166 = vsyncadd %s159, %s165
          %s167 = smul.addr %s163, 2
          %s168 = smul.addr %s167, 64
          %s169 = scalar_lea.hbm %s0, %s168
          %s170 = sshll.u32 %s162, 4
          %s171 = int_to_ptr.vmem [resolvable:$true] %s170
          %176 = dma.hbm_to_vmem [thread:$0]  %s169, 1280, %s171, %s159, 128, 128, 8
        $region28: #{tpu_custom_call.1} parent=23 // pred_fallthru
          _
      $region24: #{tpu_custom_call.1} parent=5 // pred_fallthru
        _
      %p177 = scmp.le.s32.totalorder 1, %s16
      %p178 = scmp.lt.s32.totalorder %s16, 3
      %p179 = pnand %p177, %p178
      %p180 = pneg %p179
      // Predicated region
      $region29: #{tpu_custom_call.1} parent=5 // pred_check
        _
      $region30: #{tpu_custom_call.1} parent=5 // pred_check_branch
        %182 = sbr.rel (%p179) target = $region32
      $region31: #{tpu_custom_call.1} parent=5 // pred_region
        %s183 = ssub.s32 %s16, 1
        %s184 = sand.u32 %s29, 1
        %s185 = scalar_lea.sflag [#allocation3], %s184
        %s186 = sand.u32 %s29, 1
        %s187 = smul.addr %s186, 80
        %s188 = scalar_lea.vmem [#allocation2], %s187
        // Predicated region
        $region33: #{tpu_custom_call.1} parent=31 // pred_check
          %p189 = pneg %p42
        $region34: #{tpu_custom_call.1} parent=31 // pred_check_branch
          %191 = sbr.rel (%p189) target = $region36
        $region35: #{tpu_custom_call.1} parent=31 // pred_region
          %192 = dma.done %s185, 1280
        $region36: #{tpu_custom_call.1} parent=31 // pred_fallthru
          _
        // Predicated region
        $region37: #{tpu_custom_call.1} parent=31 // pred_check
          %p193 = pneg %p63
        $region38: #{tpu_custom_call.1} parent=31 // pred_check_branch
          %195 = sbr.rel (%p193) target = $region40
        $region39: #{tpu_custom_call.1} parent=31 // pred_region
          %196 = dma.done [#allocation6], 8192
        $region40: #{tpu_custom_call.1} parent=31 // pred_fallthru
          _
        // Predicated region
        $region41: #{tpu_custom_call.1} parent=31 // pred_check
          %p197 = pneg %p84
        $region42: #{tpu_custom_call.1} parent=31 // pred_check_branch
          %199 = sbr.rel (%p197) target = $region44
        $region43: #{tpu_custom_call.1} parent=31 // pred_region
          %200 = dma.done [#allocation6], 2048
        $region44: #{tpu_custom_call.1} parent=31 // pred_fallthru
          _
        %s201 = sand.u32 %s29, 1
        %s202 = scalar_lea.sflag [#allocation3], %s201
        %s203 = sand.u32 %s29, 1
        %s204 = smul.addr %s203, 80
        %s205 = scalar_lea.vmem [#allocation2], %s204
        %p206 = pneg %p42
        %p207 = pneg %p39
        %p208 = pneg %p63
        %p209 = pneg %p60
        %p210 = pneg %p84
        %p211 = pneg %p81
        %p212 = pneg %p110
        %p213 = pneg %p107
        %s214 = sand.u32 %s97, 1
        %s215 = scalar_lea.sflag [#allocation4], %s214
        %s216 = sand.u32 %s97, 1
        %s217 = smul.addr %s216, 80
        %s218 = scalar_lea.vmem [#allocation8], %s217
        %s219 = smul.u32 10, %s21
        %s220 = smul.u32 10, %s21
        %v222 = vld [vmem:[%s188] sm:$0xff]
        %v223 = vld [vmem:[%s188 + $0x8] sm:$0xff]
        %v224 = vld [vmem:[%s188 + $0x10] sm:$0xff]
        %v225 = vld [vmem:[%s188 + $0x18] sm:$0xff]
        %v226 = vld [vmem:[%s188 + $0x20] sm:$0xff]
        %v227 = vld [vmem:[%s188 + $0x28] sm:$0xff]
        %v228 = vld [vmem:[%s188 + $0x30] sm:$0xff]
        %v229 = vld [vmem:[%s188 + $0x38] sm:$0xff]
        %v230 = vld [vmem:[%s188 + $0x40] sm:$0xff]
        %v231 = vld [vmem:[%s188 + $0x48] sm:$0xff]
        %v232 = vld [vmem:[#allocation5] sm:$0xff]
        %v233 = vld [vmem:[#allocation5 + $0x8] sm:$0xff]
        %v234 = vld [vmem:[#allocation5 + $0x10] sm:$0xff]
        %v235 = vld [vmem:[#allocation5 + $0x18] sm:$0xff]
        %v236 = vld [vmem:[#allocation5 + $0x20] sm:$0xff]
        %v237 = vld [vmem:[#allocation5 + $0x28] sm:$0xff]
        %v238 = vld [vmem:[#allocation5 + $0x30] sm:$0xff]
        %v239 = vld [vmem:[#allocation5 + $0x38] sm:$0xff]
        %v240 = vld [vmem:[#allocation5 + $0x40] sm:$0xff]
        %v241 = vld [vmem:[#allocation5 + $0x48] sm:$0xff]
        %v242 = vld [vmem:[#allocation5 + $0x50] sm:$0xff]
        %v243 = vld [vmem:[#allocation5 + $0x58] sm:$0xff]
        %v244 = vld [vmem:[#allocation5 + $0x60] sm:$0xff]
        %v245 = vld [vmem:[#allocation5 + $0x68] sm:$0xff]
        %v246 = vld [vmem:[#allocation5 + $0x70] sm:$0xff]
        %v247 = vld [vmem:[#allocation5 + $0x78] sm:$0xff]
        %v248 = vld [vmem:[#allocation5 + $0x80] sm:$0xff]
        %v249 = vld [vmem:[#allocation5 + $0x88] sm:$0xff]
        %v250 = vld [vmem:[#allocation5 + $0x90] sm:$0xff]
        %v251 = vld [vmem:[#allocation5 + $0x98] sm:$0xff]
        %v252 = vld [vmem:[#allocation5 + $0xa0] sm:$0xff]
        %v253 = vld [vmem:[#allocation5 + $0xa8] sm:$0xff]
        %v254 = vld [vmem:[#allocation5 + $0xb0] sm:$0xff]
        %v255 = vld [vmem:[#allocation5 + $0xb8] sm:$0xff]
        %v256 = vld [vmem:[#allocation5 + $0xc0] sm:$0xff]
        %v257 = vld [vmem:[#allocation5 + $0xc8] sm:$0xff]
        %v258 = vld [vmem:[#allocation5 + $0xd0] sm:$0xff]
        %v259 = vld [vmem:[#allocation5 + $0xd8] sm:$0xff]
        %v260 = vld [vmem:[#allocation5 + $0xe0] sm:$0xff]
        %v261 = vld [vmem:[#allocation5 + $0xe8] sm:$0xff]
        %v262 = vld [vmem:[#allocation5 + $0xf0] sm:$0xff]
        %v263 = vld [vmem:[#allocation5 + $0xf8] sm:$0xff]
        %v264 = vld [vmem:[#allocation5 + $0x100] sm:$0xff]
        %v265 = vld [vmem:[#allocation5 + $0x108] sm:$0xff]
        %v266 = vld [vmem:[#allocation5 + $0x110] sm:$0xff]
        %v267 = vld [vmem:[#allocation5 + $0x118] sm:$0xff]
        %v268 = vld [vmem:[#allocation5 + $0x120] sm:$0xff]
        %v269 = vld [vmem:[#allocation5 + $0x128] sm:$0xff]
        %v270 = vld [vmem:[#allocation5 + $0x130] sm:$0xff]
        %v271 = vld [vmem:[#allocation5 + $0x138] sm:$0xff]
        %v272 = vld [vmem:[#allocation5 + $0x140] sm:$0xff]
        %v273 = vld [vmem:[#allocation5 + $0x148] sm:$0xff]
        %v274 = vld [vmem:[#allocation5 + $0x150] sm:$0xff]
        %v275 = vld [vmem:[#allocation5 + $0x158] sm:$0xff]
        %v276 = vld [vmem:[#allocation5 + $0x160] sm:$0xff]
        %v277 = vld [vmem:[#allocation5 + $0x168] sm:$0xff]
        %v278 = vld [vmem:[#allocation5 + $0x170] sm:$0xff]
        %v279 = vld [vmem:[#allocation5 + $0x178] sm:$0xff]
        %v280 = vld [vmem:[#allocation5 + $0x180] sm:$0xff]
        %v281 = vld [vmem:[#allocation5 + $0x188] sm:$0xff]
        %v282 = vld [vmem:[#allocation5 + $0x190] sm:$0xff]
        %v283 = vld [vmem:[#allocation5 + $0x198] sm:$0xff]
        %v284 = vld [vmem:[#allocation5 + $0x1a0] sm:$0xff]
        %v285 = vld [vmem:[#allocation5 + $0x1a8] sm:$0xff]
        %v286 = vld [vmem:[#allocation5 + $0x1b0] sm:$0xff]
        %v287 = vld [vmem:[#allocation5 + $0x1b8] sm:$0xff]
        %v288 = vld [vmem:[#allocation5 + $0x1c0] sm:$0xff]
        %v289 = vld [vmem:[#allocation5 + $0x1c8] sm:$0xff]
        %v290 = vld [vmem:[#allocation5 + $0x1d0] sm:$0xff]
        %v291 = vld [vmem:[#allocation5 + $0x1d8] sm:$0xff]
        %v292 = vld [vmem:[#allocation5 + $0x1e0] sm:$0xff]
        %v293 = vld [vmem:[#allocation5 + $0x1e8] sm:$0xff]
        %v294 = vld [vmem:[#allocation5 + $0x1f0] sm:$0xff]
        %v295 = vld [vmem:[#allocation5 + $0x1f8] sm:$0xff]
        %v306 = vunpack.c.l.b16 %v222
        %v307 = vunpack.c.h.b16 %v222
        %v308 = vunpack.c.l.b16 %v223
        %v309 = vunpack.c.h.b16 %v223
        %v310 = vunpack.c.l.b16 %v224
        %v311 = vunpack.c.h.b16 %v224
        %v312 = vunpack.c.l.b16 %v225
        %v313 = vunpack.c.h.b16 %v225
        %v314 = vunpack.c.l.b16 %v226
        %v315 = vunpack.c.h.b16 %v226
        %v316 = vunpack.c.l.b16 %v227
        %v317 = vunpack.c.h.b16 %v227
        %v318 = vunpack.c.l.b16 %v228
        %v319 = vunpack.c.h.b16 %v228
        %v320 = vunpack.c.l.b16 %v229
        %v321 = vunpack.c.h.b16 %v229
        %v322 = vunpack.c.l.b16 %v230
        %v323 = vunpack.c.h.b16 %v230
        %v324 = vunpack.c.l.b16 %v231
        %v325 = vunpack.c.h.b16 %v231
        %v326 = vpack.c.b16 %v308, %v306
        %v327 = vpack.c.b16 %v309, %v307
        %v328 = vpack.c.b16 %v312, %v310
        %v329 = vpack.c.b16 %v313, %v311
        %v330 = vpack.c.b16 %v316, %v314
        %v331 = vpack.c.b16 %v317, %v315
        %v332 = vpack.c.b16 %v320, %v318
        %v333 = vpack.c.b16 %v321, %v319
        %v334 = vpack.c.b16 %v324, %v322
        %v335 = vpack.c.b16 %v325, %v323
        %v410 = vunpack.c.l.b16 %v232
        %v411 = vunpack.c.h.b16 %v232
        %v412 = vunpack.c.l.b16 %v233
        %v413 = vunpack.c.h.b16 %v233
        %v414 = vunpack.c.l.b16 %v234
        %v415 = vunpack.c.h.b16 %v234
        %v416 = vunpack.c.l.b16 %v235
        %v417 = vunpack.c.h.b16 %v235
        %v418 = vunpack.c.l.b16 %v236
        %v419 = vunpack.c.h.b16 %v236
        %v420 = vunpack.c.l.b16 %v237
        %v421 = vunpack.c.h.b16 %v237
        %v422 = vunpack.c.l.b16 %v238
        %v423 = vunpack.c.h.b16 %v238
        %v424 = vunpack.c.l.b16 %v239
        %v425 = vunpack.c.h.b16 %v239
        %v426 = vunpack.c.l.b16 %v240
        %v427 = vunpack.c.h.b16 %v240
        %v428 = vunpack.c.l.b16 %v241
        %v429 = vunpack.c.h.b16 %v241
        %v430 = vunpack.c.l.b16 %v242
        %v431 = vunpack.c.h.b16 %v242
        %v432 = vunpack.c.l.b16 %v243
        %v433 = vunpack.c.h.b16 %v243
        %v434 = vunpack.c.l.b16 %v244
        %v435 = vunpack.c.h.b16 %v244
        %v436 = vunpack.c.l.b16 %v245
        %v437 = vunpack.c.h.b16 %v245
        %v438 = vunpack.c.l.b16 %v246
        %v439 = vunpack.c.h.b16 %v246
        %v440 = vunpack.c.l.b16 %v247
        %v441 = vunpack.c.h.b16 %v247
        %v442 = vunpack.c.l.b16 %v248
        %v443 = vunpack.c.h.b16 %v248
        %v444 = vunpack.c.l.b16 %v249
        %v445 = vunpack.c.h.b16 %v249
        %v446 = vunpack.c.l.b16 %v250
        %v447 = vunpack.c.h.b16 %v250
        %v448 = vunpack.c.l.b16 %v251
        %v449 = vunpack.c.h.b16 %v251
        %v450 = vunpack.c.l.b16 %v252
        %v451 = vunpack.c.h.b16 %v252
        %v452 = vunpack.c.l.b16 %v253
        %v453 = vunpack.c.h.b16 %v253
        %v454 = vunpack.c.l.b16 %v254
        %v455 = vunpack.c.h.b16 %v254
        %v456 = vunpack.c.l.b16 %v255
        %v457 = vunpack.c.h.b16 %v255
        %v458 = vunpack.c.l.b16 %v256
        %v459 = vunpack.c.h.b16 %v256
        %v460 = vunpack.c.l.b16 %v257
        %v461 = vunpack.c.h.b16 %v257
        %v462 = vunpack.c.l.b16 %v258
        %v463 = vunpack.c.h.b16 %v258
        %v464 = vunpack.c.l.b16 %v259
        %v465 = vunpack.c.h.b16 %v259
        %v466 = vunpack.c.l.b16 %v260
        %v467 = vunpack.c.h.b16 %v260
        %v468 = vunpack.c.l.b16 %v261
        %v469 = vunpack.c.h.b16 %v261
        %v470 = vunpack.c.l.b16 %v262
        %v471 = vunpack.c.h.b16 %v262
        %v472 = vunpack.c.l.b16 %v263
        %v473 = vunpack.c.h.b16 %v263
        %v474 = vunpack.c.l.b16 %v264
        %v475 = vunpack.c.h.b16 %v264
        %v476 = vunpack.c.l.b16 %v265
        %v477 = vunpack.c.h.b16 %v265
        %v478 = vunpack.c.l.b16 %v266
        %v479 = vunpack.c.h.b16 %v266
        %v480 = vunpack.c.l.b16 %v267
        %v481 = vunpack.c.h.b16 %v267
        %v482 = vunpack.c.l.b16 %v268
        %v483 = vunpack.c.h.b16 %v268
        %v484 = vunpack.c.l.b16 %v269
        %v485 = vunpack.c.h.b16 %v269
        %v486 = vunpack.c.l.b16 %v270
        %v487 = vunpack.c.h.b16 %v270
        %v488 = vunpack.c.l.b16 %v271
        %v489 = vunpack.c.h.b16 %v271
        %v490 = vunpack.c.l.b16 %v272
        %v491 = vunpack.c.h.b16 %v272
        %v492 = vunpack.c.l.b16 %v273
        %v493 = vunpack.c.h.b16 %v273
        %v494 = vunpack.c.l.b16 %v274
        %v495 = vunpack.c.h.b16 %v274
        %v496 = vunpack.c.l.b16 %v275
        %v497 = vunpack.c.h.b16 %v275
        %v498 = vunpack.c.l.b16 %v276
        %v499 = vunpack.c.h.b16 %v276
        %v500 = vunpack.c.l.b16 %v277
        %v501 = vunpack.c.h.b16 %v277
        %v502 = vunpack.c.l.b16 %v278
        %v503 = vunpack.c.h.b16 %v278
        %v504 = vunpack.c.l.b16 %v279
        %v505 = vunpack.c.h.b16 %v279
        %v506 = vunpack.c.l.b16 %v280
        %v507 = vunpack.c.h.b16 %v280
        %v508 = vunpack.c.l.b16 %v281
        %v509 = vunpack.c.h.b16 %v281
        %v510 = vunpack.c.l.b16 %v282
        %v511 = vunpack.c.h.b16 %v282
        %v512 = vunpack.c.l.b16 %v283
        %v513 = vunpack.c.h.b16 %v283
        %v514 = vunpack.c.l.b16 %v284
        %v515 = vunpack.c.h.b16 %v284
        %v516 = vunpack.c.l.b16 %v285
        %v517 = vunpack.c.h.b16 %v285
        %v518 = vunpack.c.l.b16 %v286
        %v519 = vunpack.c.h.b16 %v286
        %v520 = vunpack.c.l.b16 %v287
        %v521 = vunpack.c.h.b16 %v287
        %v522 = vunpack.c.l.b16 %v288
        %v523 = vunpack.c.h.b16 %v288
        %v524 = vunpack.c.l.b16 %v289
        %v525 = vunpack.c.h.b16 %v289
        %v526 = vunpack.c.l.b16 %v290
        %v527 = vunpack.c.h.b16 %v290
        %v528 = vunpack.c.l.b16 %v291
        %v529 = vunpack.c.h.b16 %v291
        %v530 = vunpack.c.l.b16 %v292
        %v531 = vunpack.c.h.b16 %v292
        %v532 = vunpack.c.l.b16 %v293
        %v533 = vunpack.c.h.b16 %v293
        %v534 = vunpack.c.l.b16 %v294
        %v535 = vunpack.c.h.b16 %v294
        %v536 = vunpack.c.l.b16 %v295
        %v537 = vunpack.c.h.b16 %v295
        %v538 = vpack.c.b16 %v414, %v410
        %v539 = vpack.c.b16 %v415, %v411
        %v540 = vpack.c.b16 %v416, %v412
        %v541 = vpack.c.b16 %v417, %v413
        %v542 = vpack.c.b16 %v422, %v418
        %v543 = vpack.c.b16 %v423, %v419
        %v544 = vpack.c.b16 %v424, %v420
        %v545 = vpack.c.b16 %v425, %v421
        %v546 = vpack.c.b16 %v430, %v426
        %v547 = vpack.c.b16 %v431, %v427
        %v548 = vpack.c.b16 %v432, %v428
        %v549 = vpack.c.b16 %v433, %v429
        %v550 = vpack.c.b16 %v438, %v434
        %v551 = vpack.c.b16 %v439, %v435
        %v552 = vpack.c.b16 %v440, %v436
        %v553 = vpack.c.b16 %v441, %v437
        %v554 = vpack.c.b16 %v446, %v442
        %v555 = vpack.c.b16 %v447, %v443
        %v556 = vpack.c.b16 %v448, %v444
        %v557 = vpack.c.b16 %v449, %v445
        %v558 = vpack.c.b16 %v454, %v450
        %v559 = vpack.c.b16 %v455, %v451
        %v560 = vpack.c.b16 %v456, %v452
        %v561 = vpack.c.b16 %v457, %v453
        %v562 = vpack.c.b16 %v462, %v458
        %v563 = vpack.c.b16 %v463, %v459
        %v564 = vpack.c.b16 %v464, %v460
        %v565 = vpack.c.b16 %v465, %v461
        %v566 = vpack.c.b16 %v470, %v466
        %v567 = vpack.c.b16 %v471, %v467
        %v568 = vpack.c.b16 %v472, %v468
        %v569 = vpack.c.b16 %v473, %v469
        %v570 = vpack.c.b16 %v478, %v474
        %v571 = vpack.c.b16 %v479, %v475
        %v572 = vpack.c.b16 %v480, %v476
        %v573 = vpack.c.b16 %v481, %v477
        %v574 = vpack.c.b16 %v486, %v482
        %v575 = vpack.c.b16 %v487, %v483
        %v576 = vpack.c.b16 %v488, %v484
        %v577 = vpack.c.b16 %v489, %v485
        %v578 = vpack.c.b16 %v494, %v490
        %v579 = vpack.c.b16 %v495, %v491
        %v580 = vpack.c.b16 %v496, %v492
        %v581 = vpack.c.b16 %v497, %v493
        %v582 = vpack.c.b16 %v502, %v498
        %v583 = vpack.c.b16 %v503, %v499
        %v584 = vpack.c.b16 %v504, %v500
        %v585 = vpack.c.b16 %v505, %v501
        %v586 = vpack.c.b16 %v510, %v506
        %v587 = vpack.c.b16 %v511, %v507
        %v588 = vpack.c.b16 %v512, %v508
        %v589 = vpack.c.b16 %v513, %v509
        %v590 = vpack.c.b16 %v518, %v514
        %v591 = vpack.c.b16 %v519, %v515
        %v592 = vpack.c.b16 %v520, %v516
        %v593 = vpack.c.b16 %v521, %v517
        %v594 = vpack.c.b16 %v526, %v522
        %v595 = vpack.c.b16 %v527, %v523
        %v596 = vpack.c.b16 %v528, %v524
        %v597 = vpack.c.b16 %v529, %v525
        %v598 = vpack.c.b16 %v534, %v530
        %v599 = vpack.c.b16 %v535, %v531
        %v600 = vpack.c.b16 %v536, %v532
        %v601 = vpack.c.b16 %v537, %v533
        %666 = vmatprep.subr.bf16.mxu0 %v567
        %667 = vmatpush1.bf16.msra.mxu0 %v566
        %668 = vmatprep.subr.bf16.mxu0 %v563
        %669 = vmatpush1.bf16.msra.mxu0 %v562
        %670 = vmatprep.subr.bf16.mxu0 %v559
        %671 = vmatpush1.bf16.msra.mxu0 %v558
        %672 = vmatprep.subr.bf16.mxu0 %v555
        %673 = vmatpush1.bf16.msra.mxu0 %v554
        %674 = vmatprep.subr.bf16.mxu0 %v551
        %675 = vmatpush1.bf16.msra.mxu0 %v550
        %676 = vmatprep.subr.bf16.mxu0 %v547
        %677 = vmatpush1.bf16.msra.mxu0 %v546
        %678 = vmatprep.subr.bf16.mxu0 %v543
        %679 = vmatpush1.bf16.msra.mxu0 %v542
        %680 = vmatprep.subr.bf16.mxu0 %v539
        %681 = vmatpush1.bf16.msra.mxu0 %v538
        %682 = vmatprep.subr.bf16.mxu0 %v599
        %683 = vmatpush2.bf16.msra.mxu0 %v598
        %684 = vmatprep.subr.bf16.mxu0 %v595
        %685 = vmatpush2.bf16.msra.mxu0 %v594
        %686 = vmatprep.subr.bf16.mxu0 %v591
        %687 = vmatpush2.bf16.msra.mxu0 %v590
        %688 = vmatprep.subr.bf16.mxu0 %v587
        %689 = vmatpush2.bf16.msra.mxu0 %v586
        %690 = vmatprep.subr.bf16.mxu0 %v583
        %691 = vmatpush2.bf16.msra.mxu0 %v582
        %692 = vmatprep.subr.bf16.mxu0 %v579
        %693 = vmatpush2.bf16.msra.mxu0 %v578
        %694 = vmatprep.subr.bf16.mxu0 %v575
        %695 = vmatpush2.bf16.msra.mxu0 %v574
        %696 = vmatprep.subr.bf16.mxu0 %v571
        %697 = vmatpush2.bf16.msra.mxu0 %v570
        %698 = vmatprep.mubr.bf16.mxu0 %v327
        %699 = vmatmul.mubr.bf16.gmra.mxu0 %v326
        %v700 = vpop.f32.mrf.mxu0
        %v701 = vadd.f32 0.0, %v700
        %v702 = vpop.f32.mrf.mxu0
        %v703 = vadd.f32 0.0, %v702
        %v704 = vpop.f32.mrf.mxu0
        %v705 = vadd.f32 0.0, %v704
        %v706 = vpop.f32.mrf.mxu0
        %v707 = vadd.f32 0.0, %v706
        %708 = vmatprep.mubr.bf16.mxu0 %v329
        %709 = vmatmul.mubr.bf16.gmra.mxu0 %v328
        %v710 = vpop.f32.mrf.mxu0
        %v711 = vadd.f32 0.0, %v710
        %v712 = vpop.f32.mrf.mxu0
        %v713 = vadd.f32 0.0, %v712
        %v714 = vpop.f32.mrf.mxu0
        %v715 = vadd.f32 0.0, %v714
        %v716 = vpop.f32.mrf.mxu0
        %v717 = vadd.f32 0.0, %v716
        %718 = vmatprep.mubr.bf16.mxu0 %v331
        %719 = vmatmul.mubr.bf16.gmra.mxu0 %v330
        %v720 = vpop.f32.mrf.mxu0
        %v721 = vadd.f32 0.0, %v720
        %v722 = vpop.f32.mrf.mxu0
        %v723 = vadd.f32 0.0, %v722
        %v724 = vpop.f32.mrf.mxu0
        %v725 = vadd.f32 0.0, %v724
        %v726 = vpop.f32.mrf.mxu0
        %v727 = vadd.f32 0.0, %v726
        %728 = vmatprep.mubr.bf16.mxu0 %v333
        %729 = vmatmul.mubr.bf16.gmra.mxu0 %v332
        %v730 = vpop.f32.mrf.mxu0
        %v731 = vadd.f32 0.0, %v730
        %v732 = vpop.f32.mrf.mxu0
        %v733 = vadd.f32 0.0, %v732
        %v734 = vpop.f32.mrf.mxu0
        %v735 = vadd.f32 0.0, %v734
        %v736 = vpop.f32.mrf.mxu0
        %v737 = vadd.f32 0.0, %v736
        %738 = vmatprep.mubr.bf16.mxu0 %v335
        %739 = vmatmul.mubr.bf16.gmra.mxu0 %v334
        %v740 = vpop.f32.mrf.mxu0
        %v741 = vadd.f32 0.0, %v740
        %v742 = vpop.f32.mrf.mxu0
        %v743 = vadd.f32 0.0, %v742
        %v744 = vpop.f32.mrf.mxu0
        %v745 = vadd.f32 0.0, %v744
        %v746 = vpop.f32.mrf.mxu0
        %v747 = vadd.f32 0.0, %v746
        %748 = vdwg.mxu0
        %749 = vmatprep.subr.bf16.mxu0 %v569
        %750 = vmatpush1.bf16.msra.mxu0 %v568
        %751 = vmatprep.subr.bf16.mxu0 %v565
        %752 = vmatpush1.bf16.msra.mxu0 %v564
        %753 = vmatprep.subr.bf16.mxu0 %v561
        %754 = vmatpush1.bf16.msra.mxu0 %v560
        %755 = vmatprep.subr.bf16.mxu0 %v557
        %756 = vmatpush1.bf16.msra.mxu0 %v556
        %757 = vmatprep.subr.bf16.mxu0 %v553
        %758 = vmatpush1.bf16.msra.mxu0 %v552
        %759 = vmatprep.subr.bf16.mxu0 %v549
        %760 = vmatpush1.bf16.msra.mxu0 %v548
        %761 = vmatprep.subr.bf16.mxu0 %v545
        %762 = vmatpush1.bf16.msra.mxu0 %v544
        %763 = vmatprep.subr.bf16.mxu0 %v541
        %764 = vmatpush1.bf16.msra.mxu0 %v540
        %765 = vmatprep.subr.bf16.mxu0 %v601
        %766 = vmatpush2.bf16.msra.mxu0 %v600
        %767 = vmatprep.subr.bf16.mxu0 %v597
        %768 = vmatpush2.bf16.msra.mxu0 %v596
        %769 = vmatprep.subr.bf16.mxu0 %v593
        %770 = vmatpush2.bf16.msra.mxu0 %v592
        %771 = vmatprep.subr.bf16.mxu0 %v589
        %772 = vmatpush2.bf16.msra.mxu0 %v588
        %773 = vmatprep.subr.bf16.mxu0 %v585
        %774 = vmatpush2.bf16.msra.mxu0 %v584
        %775 = vmatprep.subr.bf16.mxu0 %v581
        %776 = vmatpush2.bf16.msra.mxu0 %v580
        %777 = vmatprep.subr.bf16.mxu0 %v577
        %778 = vmatpush2.bf16.msra.mxu0 %v576
        %779 = vmatprep.subr.bf16.mxu0 %v573
        %780 = vmatpush2.bf16.msra.mxu0 %v572
        %781 = vmatprep.mubr.bf16.mxu0 %v327
        %782 = vmatmul.mubr.bf16.gmra.mxu0 %v326
        %v783 = vpop.f32.mrf.mxu0
        %v784 = vadd.f32 0.0, %v783
        %v785 = vpop.f32.mrf.mxu0
        %v786 = vadd.f32 0.0, %v785
        %v787 = vpop.f32.mrf.mxu0
        %v788 = vadd.f32 0.0, %v787
        %v789 = vpop.f32.mrf.mxu0
        %v790 = vadd.f32 0.0, %v789
        %791 = vmatprep.mubr.bf16.mxu0 %v329
        %792 = vmatmul.mubr.bf16.gmra.mxu0 %v328
        %v793 = vpop.f32.mrf.mxu0
        %v794 = vadd.f32 0.0, %v793
        %v795 = vpop.f32.mrf.mxu0
        %v796 = vadd.f32 0.0, %v795
        %v797 = vpop.f32.mrf.mxu0
        %v798 = vadd.f32 0.0, %v797
        %v799 = vpop.f32.mrf.mxu0
        %v800 = vadd.f32 0.0, %v799
        %801 = vmatprep.mubr.bf16.mxu0 %v331
        %802 = vmatmul.mubr.bf16.gmra.mxu0 %v330
        %v803 = vpop.f32.mrf.mxu0
        %v804 = vadd.f32 0.0, %v803
        %v805 = vpop.f32.mrf.mxu0
        %v806 = vadd.f32 0.0, %v805
        %v807 = vpop.f32.mrf.mxu0
        %v808 = vadd.f32 0.0, %v807
        %v809 = vpop.f32.mrf.mxu0
        %v810 = vadd.f32 0.0, %v809
        %811 = vmatprep.mubr.bf16.mxu0 %v333
        %812 = vmatmul.mubr.bf16.gmra.mxu0 %v332
        %v813 = vpop.f32.mrf.mxu0
        %v814 = vadd.f32 0.0, %v813
        %v815 = vpop.f32.mrf.mxu0
        %v816 = vadd.f32 0.0, %v815
        %v817 = vpop.f32.mrf.mxu0
        %v818 = vadd.f32 0.0, %v817
        %v819 = vpop.f32.mrf.mxu0
        %v820 = vadd.f32 0.0, %v819
        %821 = vmatprep.mubr.bf16.mxu0 %v335
        %822 = vmatmul.mubr.bf16.gmra.mxu0 %v334
        %v823 = vpop.f32.mrf.mxu0
        %v824 = vadd.f32 0.0, %v823
        %v825 = vpop.f32.mrf.mxu0
        %v826 = vadd.f32 0.0, %v825
        %v827 = vpop.f32.mrf.mxu0
        %v828 = vadd.f32 0.0, %v827
        %v829 = vpop.f32.mrf.mxu0
        %v830 = vadd.f32 0.0, %v829
        %831 = vdwg.mxu0
        %v832 = vmul.f32 %v701, %v701
        %v833 = vmul.f32 %v703, %v703
        %v834 = vmul.f32 %v705, %v705
        %v835 = vmul.f32 %v707, %v707
        %v836 = vmul.f32 %v711, %v711
        %v837 = vmul.f32 %v713, %v713
        %v838 = vmul.f32 %v715, %v715
        %v839 = vmul.f32 %v717, %v717
        %v840 = vmul.f32 %v721, %v721
        %v841 = vmul.f32 %v723, %v723
        %v842 = vmul.f32 %v725, %v725
        %v843 = vmul.f32 %v727, %v727
        %v844 = vmul.f32 %v731, %v731
        %v845 = vmul.f32 %v733, %v733
        %v846 = vmul.f32 %v735, %v735
        %v847 = vmul.f32 %v737, %v737
        %v848 = vmul.f32 %v741, %v741
        %v849 = vmul.f32 %v743, %v743
        %v850 = vmul.f32 %v745, %v745
        %v851 = vmul.f32 %v747, %v747
        %v852 = vmul.f32 %v784, %v784
        %v853 = vmul.f32 %v786, %v786
        %v854 = vmul.f32 %v788, %v788
        %v855 = vmul.f32 %v790, %v790
        %v856 = vmul.f32 %v794, %v794
        %v857 = vmul.f32 %v796, %v796
        %v858 = vmul.f32 %v798, %v798
        %v859 = vmul.f32 %v800, %v800
        %v860 = vmul.f32 %v804, %v804
        %v861 = vmul.f32 %v806, %v806
        %v862 = vmul.f32 %v808, %v808
        %v863 = vmul.f32 %v810, %v810
        %v864 = vmul.f32 %v814, %v814
        %v865 = vmul.f32 %v816, %v816
        %v866 = vmul.f32 %v818, %v818
        %v867 = vmul.f32 %v820, %v820
        %v868 = vmul.f32 %v824, %v824
        %v869 = vmul.f32 %v826, %v826
        %v870 = vmul.f32 %v828, %v828
        %v871 = vmul.f32 %v830, %v830
        %v872 = vadd.f32 %v832, %v852
        %v873 = vadd.f32 %v833, %v853
        %v874 = vadd.f32 %v834, %v854
        %v875 = vadd.f32 %v835, %v855
        %v876 = vadd.f32 %v836, %v856
        %v877 = vadd.f32 %v837, %v857
        %v878 = vadd.f32 %v838, %v858
        %v879 = vadd.f32 %v839, %v859
        %v880 = vadd.f32 %v840, %v860
        %v881 = vadd.f32 %v841, %v861
        %v882 = vadd.f32 %v842, %v862
        %v883 = vadd.f32 %v843, %v863
        %v884 = vadd.f32 %v844, %v864
        %v885 = vadd.f32 %v845, %v865
        %v886 = vadd.f32 %v846, %v866
        %v887 = vadd.f32 %v847, %v867
        %v888 = vadd.f32 %v848, %v868
        %v889 = vadd.f32 %v849, %v869
        %v890 = vadd.f32 %v850, %v870
        %v891 = vadd.f32 %v851, %v871
        %v892 = vpack.c.bf16 %v874, %v872
        %v893 = vpack.c.bf16 %v875, %v873
        %v894 = vpack.c.bf16 %v878, %v876
        %v895 = vpack.c.bf16 %v879, %v877
        %v896 = vpack.c.bf16 %v882, %v880
        %v897 = vpack.c.bf16 %v883, %v881
        %v898 = vpack.c.bf16 %v886, %v884
        %v899 = vpack.c.bf16 %v887, %v885
        %v900 = vpack.c.bf16 %v890, %v888
        %v901 = vpack.c.bf16 %v891, %v889
        %v902 = vld [vmem:[#allocation7] sm:$0xf]
        %v903 = vld [vmem:[#allocation7 + $0x4] sm:$0xf]
        %v904 = vld [vmem:[#allocation7 + $0x8] sm:$0xf]
        %v905 = vld [vmem:[#allocation7 + $0xc] sm:$0xf]
        %v906 = vld [vmem:[#allocation7 + $0x10] sm:$0xf]
        %v907 = vld [vmem:[#allocation7 + $0x14] sm:$0xf]
        %v908 = vld [vmem:[#allocation7 + $0x18] sm:$0xf]
        %v909 = vld [vmem:[#allocation7 + $0x1c] sm:$0xf]
        %v910 = vld [vmem:[#allocation7 + $0x20] sm:$0xf]
        %v911 = vld [vmem:[#allocation7 + $0x24] sm:$0xf]
        %v912 = vld [vmem:[#allocation7 + $0x28] sm:$0xf]
        %v913 = vld [vmem:[#allocation7 + $0x2c] sm:$0xf]
        %v914 = vld [vmem:[#allocation7 + $0x30] sm:$0xf]
        %v915 = vld [vmem:[#allocation7 + $0x34] sm:$0xf]
        %v916 = vld [vmem:[#allocation7 + $0x38] sm:$0xf]
        %v917 = vld [vmem:[#allocation7 + $0x3c] sm:$0xf]
        %v918 = vld [vmem:[#allocation7 + $0x40] sm:$0xf]
        %v919 = vld [vmem:[#allocation7 + $0x44] sm:$0xf]
        %v920 = vld [vmem:[#allocation7 + $0x48] sm:$0xf]
        %v921 = vld [vmem:[#allocation7 + $0x4c] sm:$0xf]
        %v922 = vld [vmem:[#allocation7 + $0x50] sm:$0xf]
        %v923 = vld [vmem:[#allocation7 + $0x54] sm:$0xf]
        %v924 = vld [vmem:[#allocation7 + $0x58] sm:$0xf]
        %v925 = vld [vmem:[#allocation7 + $0x5c] sm:$0xf]
        %v926 = vld [vmem:[#allocation7 + $0x60] sm:$0xf]
        %v927 = vld [vmem:[#allocation7 + $0x64] sm:$0xf]
        %v928 = vld [vmem:[#allocation7 + $0x68] sm:$0xf]
        %v929 = vld [vmem:[#allocation7 + $0x6c] sm:$0xf]
        %v930 = vld [vmem:[#allocation7 + $0x70] sm:$0xf]
        %v931 = vld [vmem:[#allocation7 + $0x74] sm:$0xf]
        %v932 = vld [vmem:[#allocation7 + $0x78] sm:$0xf]
        %v933 = vld [vmem:[#allocation7 + $0x7c] sm:$0xf]
        %v966 = vunpack.c.l.b16 %v902
        %v967 = vunpack.c.l.b16 %v903
        %v968 = vunpack.c.l.b16 %v904
        %v969 = vunpack.c.l.b16 %v905
        %v970 = vunpack.c.l.b16 %v906
        %v971 = vunpack.c.l.b16 %v907
        %v972 = vunpack.c.l.b16 %v908
        %v973 = vunpack.c.l.b16 %v909
        %v974 = vunpack.c.l.b16 %v910
        %v975 = vunpack.c.l.b16 %v911
        %v976 = vunpack.c.l.b16 %v912
        %v977 = vunpack.c.l.b16 %v913
        %v978 = vunpack.c.l.b16 %v914
        %v979 = vunpack.c.l.b16 %v915
        %v980 = vunpack.c.l.b16 %v916
        %v981 = vunpack.c.l.b16 %v917
        %v982 = vunpack.c.l.b16 %v918
        %v983 = vunpack.c.l.b16 %v919
        %v984 = vunpack.c.l.b16 %v920
        %v985 = vunpack.c.l.b16 %v921
        %v986 = vunpack.c.l.b16 %v922
        %v987 = vunpack.c.l.b16 %v923
        %v988 = vunpack.c.l.b16 %v924
        %v989 = vunpack.c.l.b16 %v925
        %v990 = vunpack.c.l.b16 %v926
        %v991 = vunpack.c.l.b16 %v927
        %v992 = vunpack.c.l.b16 %v928
        %v993 = vunpack.c.l.b16 %v929
        %v994 = vunpack.c.l.b16 %v930
        %v995 = vunpack.c.l.b16 %v931
        %v996 = vunpack.c.l.b16 %v932
        %v997 = vunpack.c.l.b16 %v933
        %v998 = vpack.c.b16 %v967, %v966
        %v999 = vpack.c.b16 %v969, %v968
        %v1000 = vpack.c.b16 %v971, %v970
        %v1001 = vpack.c.b16 %v973, %v972
        %v1002 = vpack.c.b16 %v975, %v974
        %v1003 = vpack.c.b16 %v977, %v976
        %v1004 = vpack.c.b16 %v979, %v978
        %v1005 = vpack.c.b16 %v981, %v980
        %v1006 = vpack.c.b16 %v983, %v982
        %v1007 = vpack.c.b16 %v985, %v984
        %v1008 = vpack.c.b16 %v987, %v986
        %v1009 = vpack.c.b16 %v989, %v988
        %v1010 = vpack.c.b16 %v991, %v990
        %v1011 = vpack.c.b16 %v993, %v992
        %v1012 = vpack.c.b16 %v995, %v994
        %v1013 = vpack.c.b16 %v997, %v996
        %1030 = vmatprep.subr.bf16.mxu0 0
        %1031 = vmatpush1.bf16.msra.mxu0 %v1005
        %1032 = vmatprep.subr.bf16.mxu0 0
        %1033 = vmatpush1.bf16.msra.mxu0 %v1004
        %1034 = vmatprep.subr.bf16.mxu0 0
        %1035 = vmatpush1.bf16.msra.mxu0 %v1003
        %1036 = vmatprep.subr.bf16.mxu0 0
        %1037 = vmatpush1.bf16.msra.mxu0 %v1002
        %1038 = vmatprep.subr.bf16.mxu0 0
        %1039 = vmatpush1.bf16.msra.mxu0 %v1001
        %1040 = vmatprep.subr.bf16.mxu0 0
        %1041 = vmatpush1.bf16.msra.mxu0 %v1000
        %1042 = vmatprep.subr.bf16.mxu0 0
        %1043 = vmatpush1.bf16.msra.mxu0 %v999
        %1044 = vmatprep.subr.bf16.mxu0 0
        %1045 = vmatpush1.bf16.msra.mxu0 %v998
        %1046 = vmatprep.subr.bf16.mxu0 0
        %1047 = vmatpush2.bf16.msra.mxu0 %v1013
        %1048 = vmatprep.subr.bf16.mxu0 0
        %1049 = vmatpush2.bf16.msra.mxu0 %v1012
        %1050 = vmatprep.subr.bf16.mxu0 0
        %1051 = vmatpush2.bf16.msra.mxu0 %v1011
        %1052 = vmatprep.subr.bf16.mxu0 0
        %1053 = vmatpush2.bf16.msra.mxu0 %v1010
        %1054 = vmatprep.subr.bf16.mxu0 0
        %1055 = vmatpush2.bf16.msra.mxu0 %v1009
        %1056 = vmatprep.subr.bf16.mxu0 0
        %1057 = vmatpush2.bf16.msra.mxu0 %v1008
        %1058 = vmatprep.subr.bf16.mxu0 0
        %1059 = vmatpush2.bf16.msra.mxu0 %v1007
        %1060 = vmatprep.subr.bf16.mxu0 0
        %1061 = vmatpush2.bf16.msra.mxu0 %v1006
        %1062 = vmatprep.mubr.bf16.mxu0 %v893
        %1063 = vmatmul.mubr.bf16.gmra.mxu0 %v892
        %v1064 = vpop.f32.mrf.mxu0
        %v1065 = vadd.f32 0.0, %v1064
        %v1066 = vpop.f32.mrf.mxu0
        %v1067 = vpop.f32.mrf.mxu0
        %v1068 = vadd.f32 0.0, %v1067
        %v1069 = vpop.f32.mrf.mxu0
        %1070 = vmatprep.mubr.bf16.mxu0 %v895
        %1071 = vmatmul.mubr.bf16.gmra.mxu0 %v894
        %v1072 = vpop.f32.mrf.mxu0
        %v1073 = vadd.f32 0.0, %v1072
        %v1074 = vpop.f32.mrf.mxu0
        %v1075 = vpop.f32.mrf.mxu0
        %v1076 = vadd.f32 0.0, %v1075
        %v1077 = vpop.f32.mrf.mxu0
        %1078 = vmatprep.mubr.bf16.mxu0 %v897
        %1079 = vmatmul.mubr.bf16.gmra.mxu0 %v896
        %v1080 = vpop.f32.mrf.mxu0
        %v1081 = vadd.f32 0.0, %v1080
        %v1082 = vpop.f32.mrf.mxu0
        %v1083 = vpop.f32.mrf.mxu0
        %v1084 = vadd.f32 0.0, %v1083
        %v1085 = vpop.f32.mrf.mxu0
        %1086 = vmatprep.mubr.bf16.mxu0 %v899
        %1087 = vmatmul.mubr.bf16.gmra.mxu0 %v898
        %v1088 = vpop.f32.mrf.mxu0
        %v1089 = vadd.f32 0.0, %v1088
        %v1090 = vpop.f32.mrf.mxu0
        %v1091 = vpop.f32.mrf.mxu0
        %v1092 = vadd.f32 0.0, %v1091
        %v1093 = vpop.f32.mrf.mxu0
        %1094 = vmatprep.mubr.bf16.mxu0 %v901
        %1095 = vmatmul.mubr.bf16.gmra.mxu0 %v900
        %v1096 = vpop.f32.mrf.mxu0
        %v1097 = vadd.f32 0.0, %v1096
        %v1098 = vpop.f32.mrf.mxu0
        %v1099 = vpop.f32.mrf.mxu0
        %v1100 = vadd.f32 0.0, %v1099
        %v1101 = vpop.f32.mrf.mxu0
        %1102 = vdwg.mxu0
        %v1103 = vrsqrt.pop %v1065
        %v1104 = vmul.f32 %v1065, %v1103
        %vm1105 = vcmp.eq.f32.partialorder %v1065, inf
        %v1106 = vsel %vm1105, %v1065, %v1104
        %vm1107 = vcmp.eq.f32.partialorder %v1065, 0.0
        %v1108 = vand.u32 %v1065, 2147483648
        %v1109 = vsel %vm1107, %v1108, %v1106
        %v1110 = vrsqrt.pop %v1068
        %v1111 = vmul.f32 %v1068, %v1110
        %vm1112 = vcmp.eq.f32.partialorder %v1068, inf
        %v1113 = vsel %vm1112, %v1068, %v1111
        %vm1114 = vcmp.eq.f32.partialorder %v1068, 0.0
        %v1115 = vand.u32 %v1068, 2147483648
        %v1116 = vsel %vm1114, %v1115, %v1113
        %v1117 = vrsqrt.pop %v1073
        %v1118 = vmul.f32 %v1073, %v1117
        %vm1119 = vcmp.eq.f32.partialorder %v1073, inf
        %v1120 = vsel %vm1119, %v1073, %v1118
        %vm1121 = vcmp.eq.f32.partialorder %v1073, 0.0
        %v1122 = vand.u32 %v1073, 2147483648
        %v1123 = vsel %vm1121, %v1122, %v1120
        %v1124 = vrsqrt.pop %v1076
        %v1125 = vmul.f32 %v1076, %v1124
        %vm1126 = vcmp.eq.f32.partialorder %v1076, inf
        %v1127 = vsel %vm1126, %v1076, %v1125
        %vm1128 = vcmp.eq.f32.partialorder %v1076, 0.0
        %v1129 = vand.u32 %v1076, 2147483648
        %v1130 = vsel %vm1128, %v1129, %v1127
        %v1131 = vrsqrt.pop %v1081
        %v1132 = vmul.f32 %v1081, %v1131
        %vm1133 = vcmp.eq.f32.partialorder %v1081, inf
        %v1134 = vsel %vm1133, %v1081, %v1132
        %vm1135 = vcmp.eq.f32.partialorder %v1081, 0.0
        %v1136 = vand.u32 %v1081, 2147483648
        %v1137 = vsel %vm1135, %v1136, %v1134
        %v1138 = vrsqrt.pop %v1084
        %v1139 = vmul.f32 %v1084, %v1138
        %vm1140 = vcmp.eq.f32.partialorder %v1084, inf
        %v1141 = vsel %vm1140, %v1084, %v1139
        %vm1142 = vcmp.eq.f32.partialorder %v1084, 0.0
        %v1143 = vand.u32 %v1084, 2147483648
        %v1144 = vsel %vm1142, %v1143, %v1141
        %v1145 = vrsqrt.pop %v1089
        %v1146 = vmul.f32 %v1089, %v1145
        %vm1147 = vcmp.eq.f32.partialorder %v1089, inf
        %v1148 = vsel %vm1147, %v1089, %v1146
        %vm1149 = vcmp.eq.f32.partialorder %v1089, 0.0
        %v1150 = vand.u32 %v1089, 2147483648
        %v1151 = vsel %vm1149, %v1150, %v1148
        %v1152 = vrsqrt.pop %v1092
        %v1153 = vmul.f32 %v1092, %v1152
        %vm1154 = vcmp.eq.f32.partialorder %v1092, inf
        %v1155 = vsel %vm1154, %v1092, %v1153
        %vm1156 = vcmp.eq.f32.partialorder %v1092, 0.0
        %v1157 = vand.u32 %v1092, 2147483648
        %v1158 = vsel %vm1156, %v1157, %v1155
        %v1159 = vrsqrt.pop %v1097
        %v1160 = vmul.f32 %v1097, %v1159
        %vm1161 = vcmp.eq.f32.partialorder %v1097, inf
        %v1162 = vsel %vm1161, %v1097, %v1160
        %vm1163 = vcmp.eq.f32.partialorder %v1097, 0.0
        %v1164 = vand.u32 %v1097, 2147483648
        %v1165 = vsel %vm1163, %v1164, %v1162
        %v1166 = vrsqrt.pop %v1100
        %v1167 = vmul.f32 %v1100, %v1166
        %vm1168 = vcmp.eq.f32.partialorder %v1100, inf
        %v1169 = vsel %vm1168, %v1100, %v1167
        %vm1170 = vcmp.eq.f32.partialorder %v1100, 0.0
        %v1171 = vand.u32 %v1100, 2147483648
        %v1172 = vsel %vm1170, %v1171, %v1169
        %1173 = vst [vmem:[%s218] sm:$0xff] %v1109
        %1174 = vst [vmem:[%s218 + $0x8] sm:$0xff] %v1116
        %1175 = vst [vmem:[%s218 + $0x10] sm:$0xff] %v1123
        %1176 = vst [vmem:[%s218 + $0x18] sm:$0xff] %v1130
        %1177 = vst [vmem:[%s218 + $0x20] sm:$0xff] %v1137
        %1178 = vst [vmem:[%s218 + $0x28] sm:$0xff] %v1144
        %1179 = vst [vmem:[%s218 + $0x30] sm:$0xff] %v1151
        %1180 = vst [vmem:[%s218 + $0x38] sm:$0xff] %v1158
        %1181 = vst [vmem:[%s218 + $0x40] sm:$0xff] %v1165
        %1182 = vst [vmem:[%s218 + $0x48] sm:$0xff] %v1172
        %s1183 = sand.u32 %s97, 1
        %s1184 = scalar_lea.sflag [#allocation4], %s1183
        %s1185 = sand.u32 %s97, 1
        %s1186 = smul.addr %s1185, 80
        %s1187 = scalar_lea.vmem [#allocation8], %s1186
        // Predicated region
        $region45: #{tpu_custom_call.1} parent=31 // pred_check
          %p1188 = pneg %p107
        $region46: #{tpu_custom_call.1} parent=31 // pred_check_branch
          %1190 = sbr.rel (%p1188) target = $region48
        $region47: #{tpu_custom_call.1} parent=31 // pred_region
          %s1191 = smul.u32 10, %s21
          %s1193 = ssub.s32 1280, 1280
          %1194 = vsyncadd %s1184, %s1193
          %s1195 = smul.addr %s1191, 128
          %s1196 = scalar_lea.hbm %s3, %s1195
          %s1197 = sshll.u32 %s1187, 4
          %s1198 = int_to_ptr.vmem [resolvable:$true] %s1197
          %1203 = dma.vmem_to_hbm [thread:$0]  %s1198, 1280, %s1196, %s1184, 128, 128, 8
        $region48: #{tpu_custom_call.1} parent=31 // pred_fallthru
          _
      $region32: #{tpu_custom_call.1} parent=5 // pred_fallthru
        _
      %p1204 = scmp.le.s32.totalorder 2, %s16
      // Predicated region
      $region49: #{tpu_custom_call.1} parent=5 // pred_check
        %p1205 = pneg %p1204
      $region50: #{tpu_custom_call.1} parent=5 // pred_check_branch
        %1207 = sbr.rel (%p1205) target = $region52
      $region51: #{tpu_custom_call.1} parent=5 // pred_region
        %s1208 = ssub.s32 %s16, 2
        // Predicated region
        $region53: #{tpu_custom_call.1} parent=51 // pred_check
          %p1209 = pneg %p113
        $region54: #{tpu_custom_call.1} parent=51 // pred_check_branch
          %1211 = sbr.rel (%p1209) target = $region56
        $region55: #{tpu_custom_call.1} parent=51 // pred_region
          %s1212 = sand.u32 %s98, 1
          %s1213 = scalar_lea.sflag [#allocation4], %s1212
          %s1214 = sand.u32 %s98, 1
          %s1215 = smul.addr %s1214, 80
          %s1216 = scalar_lea.vmem [#allocation8], %s1215
          %1217 = dma.done %s1213, 1280
        $region56: #{tpu_custom_call.1} parent=51 // pred_fallthru
          _
      $region52: #{tpu_custom_call.1} parent=5 // pred_fallthru
        _
    $region6: #{tpu_custom_call.1} parent=1 // loop_footer
      %s20 = sadd.s32 1, %s16
    $region7: #{tpu_custom_call.1} parent=1 // loop_footer_branch
      %15 = sbr.rel target = $region3
    $region8: #{tpu_custom_call.1} parent=1 // loop_exit
      _
    %1218 = vsyncpa [#allocation3], 1
    %s1219 = scalar_lea.sflag [#allocation3], 1
    %1220 = vsyncpa %s1219, 1
    %1221 = vsyncpa [#allocation6], 1
    %1222 = vsyncpa [#allocation4], 1
    %s1223 = scalar_lea.sflag [#allocation4], 1
    %1224 = vsyncpa %s1223, 1

</llo_original>
